<compile_context>
chip_gen: v6e
topology: v6e:2x2x1
jax: 0.10.0
libtpu: 0.0.40
codegen_flags: <defaults>
</compile_context>

<pallas_src>
import math

import jax
import jax.numpy as jnp
from jax.experimental import pallas as pl
from jax.experimental.pallas import tpu as pltpu


def _round8(n):
    return ((n + 7) // 8) * 8


def _round128(n):
    return ((n + 127) // 128) * 128


def _param_layout(state_size, hidden_size, action_size):
    """Row offsets for the single packed [rows, width] f32 parameter buffer.

    Every segment starts on an 8-row (sublane) boundary so in-kernel static
    slices stay tile-aligned.  Width is padded to a multiple of 128 lanes so
    every param row is a full 512 B (unmasked vld, good DMA granularity)."""
    h2 = 2 * hidden_size
    width = _round128(max(h2, hidden_size, 2 * action_size))
    offs = {}
    r = 0
    for name, rows in (("w1", state_size), ("b1", 1),
                       ("w2", h2), ("b2", 1),
                       ("wh", hidden_size), ("bh", 1)):
        offs[name] = r
        r = _round8(r + rows)
    return offs, r, width


def _make_kernel(state_size, hidden_size, action_size, offs, out_w):
    S, H, A = state_size, hidden_size, action_size
    H2 = 2 * H
    LOG_2PI_HALF = 0.5 * math.log(2.0 * math.pi)

    def kernel(x_ref, eps_ref, p_ref, out_ref):
        x = x_ref[...]                                           # (TM, S)

        # actor_fc_1 -> relu
        w1 = p_ref[offs["w1"]:offs["w1"] + S, 0:H2]
        b1 = p_ref[offs["b1"]:offs["b1"] + 1, 0:H2]
        h1 = jnp.maximum(
            jnp.dot(x, w1, preferred_element_type=jnp.float32) + b1, 0.0)

        # actor_fc_2 -> relu
        w2 = p_ref[offs["w2"]:offs["w2"] + H2, 0:H]
        b2 = p_ref[offs["b2"]:offs["b2"] + 1, 0:H]
        h2 = jnp.maximum(
            jnp.dot(h1, w2, preferred_element_type=jnp.float32) + b2, 0.0)

        # fused mu|sigma head: one (H, 2A) matmul instead of two (H, A) matmuls
        wh = p_ref[offs["wh"]:offs["wh"] + H, 0:2 * A]
        bh = p_ref[offs["bh"]:offs["bh"] + 1, 0:2 * A]
        head = jnp.dot(h2, wh, preferred_element_type=jnp.float32) + bh

        mu = jnp.tanh(head[:, 0:A])
        sig_logits = head[:, A:2 * A]
        # F.softplus(sig_logits) + 5e-5 (default threshold=20 linear branch);
        # the jnp.minimum guard keeps the non-selected exp branch finite.
        sigma = jnp.where(
            sig_logits > 20.0, sig_logits,
            jnp.log1p(jnp.exp(jnp.minimum(sig_logits, 20.0)))) + 5e-5

        # Normal(mu, sigma).sample() then clamp, then log_prob of the clamped
        # action -- exactly the order used by the PyTorch act().
        eps = eps_ref[...]                                       # (TM, A)
        action = jnp.clip(mu + sigma * eps, -1.0, 1.0)

        inv_sigma = 1.0 / sigma
        z = (action - mu) * inv_sigma
        log_probs = -0.5 * z * z - jnp.log(sigma) - LOG_2PI_HALF

        # Lane-dense full-width store: [action | log_probs | zero pad] -> (TM, 128)
        tm = out_ref.shape[0]
        pad = jnp.zeros((tm, out_w - 2 * A), jnp.float32)
        out_ref[...] = jnp.concatenate([action, log_probs, pad], axis=-1)

    return kernel


def pack_actor_params(params, state_size, hidden_size, action_size):
    """Pack the 8 (already [in,out]-transposed) tensors into one aligned buffer."""
    w1, b1, w2, b2, wmu, bmu, wsg, bsg = params
    h2 = 2 * hidden_size
    offs, rows, width = _param_layout(state_size, hidden_size, action_size)
    wh = jnp.concatenate([wmu, wsg], axis=1)       # [H, 2A]
    bh = jnp.concatenate([bmu, bsg], axis=1)       # [1, 2A]
    p = jnp.zeros((rows, width), jnp.float32)
    p = p.at[offs["w1"]:offs["w1"] + state_size, 0:h2].set(w1)
    p = p.at[offs["b1"]:offs["b1"] + 1, 0:h2].set(b1)
    p = p.at[offs["w2"]:offs["w2"] + h2, 0:hidden_size].set(w2)
    p = p.at[offs["b2"]:offs["b2"] + 1, 0:hidden_size].set(b2)
    p = p.at[offs["wh"]:offs["wh"] + hidden_size, 0:2 * action_size].set(wh)
    p = p.at[offs["bh"]:offs["bh"] + 1, 0:2 * action_size].set(bh)
    return p


def actor_critic_act(states, packed_params, key, *, state_size, hidden_size,
                     action_size, tile_m=1024):
    """act(states): (B, state_size) -> (action, log_probs), each (B, action_size)."""
    states = jnp.asarray(states, jnp.float32).reshape(-1, state_size)
    b = states.shape[0]
    offs, rows, width = _param_layout(state_size, hidden_size, action_size)
    out_w = _round128(2 * action_size)

    # eps ~ N(0,1): exactly B*A values, generated outside the kernel (the TPU
    # stateful PRNG has no interpret-mode lowering and over-drew EUP work).
    eps = jax.random.normal(key, (b, action_size), jnp.float32)

    # Large tiles amortize per-step pipeline overhead; keep >= 2 grid steps
    # when the batch allows so v7x can shard the "parallel" axis over both TCs.
    tm = min(tile_m, max(8, _round8(-(-b // 2))))
    b_pad = pl.cdiv(b, tm) * tm
    if b_pad != b:
        states = jnp.pad(states, ((0, b_pad - b), (0, 0)))
        eps = jnp.pad(eps, ((0, b_pad - b), (0, 0)))
    grid = (b_pad // tm,)

    flops = 2 * b_pad * (state_size * 2 * hidden_size
                         + 2 * hidden_size * hidden_size
                         + hidden_size * 2 * action_size)
    transcendentals = b_pad * 4 * action_size          # tanh, exp, log1p, log
    bytes_accessed = 4 * (b_pad * (state_size + action_size + out_w)
                          + rows * width)

    kernel = _make_kernel(state_size, hidden_size, action_size, offs, out_w)
    out = pl.pallas_call(
        kernel,
        out_shape=jax.ShapeDtypeStruct((b_pad, out_w), jnp.float32),
        grid=grid,
        in_specs=[
            pl.BlockSpec((tm, state_size), lambda i: (i, 0)),    # states tile
            pl.BlockSpec((tm, action_size), lambda i: (i, 0)),   # eps tile
            pl.BlockSpec((rows, width), lambda i: (0, 0)),       # packed params (resident)
        ],
        out_specs=pl.BlockSpec((tm, out_w), lambda i: (i, 0)),   # lane-dense output
        compiler_params=pltpu.CompilerParams(
            dimension_semantics=("parallel",)),
        cost_estimate=pl.CostEstimate(
            flops=flops, transcendentals=transcendentals,
            bytes_accessed=bytes_accessed),
    )(states, eps, packed_params)

    action = out[:b, 0:action_size]
    log_probs = out[:b, action_size:2 * action_size]
    return action, log_probs


def actor_critic_forward(x, packed_params, key, *, state_size, hidden_size,
                         action_size):
    """ActorCriticNet.forward(x): reshape to (1, -1), then act()."""
    state = jnp.asarray(x, jnp.float32).reshape(1, -1)
    return actor_critic_act(state, packed_params, key,
                            state_size=state_size, hidden_size=hidden_size,
                            action_size=action_size)


def init_linear(key, in_f, out_f, weight_scale=1.0):
    """PyTorch-style init U(-1/sqrt(fan_in), 1/sqrt(fan_in));
    weight_scale mimics `weight.data.mul_(0.01)` (weights only)."""
    kw, kb = jax.random.split(key)
    bound = 1.0 / math.sqrt(in_f)
    w = jax.random.uniform(kw, (out_f, in_f), jnp.float32, -bound, bound) * weight_scale
    b = jax.random.uniform(kb, (out_f,), jnp.float32, -bound, bound)
    return w.T, b.reshape(1, out_f)            # kernel layout: W^T [in,out], bias [1,out]


def init_actor_params(key, state_size, action_size, hidden_size):
    k1, k2, k3, k4 = jax.random.split(key, 4)
    w1, b1 = init_linear(k1, state_size, 2 * hidden_size)
    w2, b2 = init_linear(k2, 2 * hidden_size, hidden_size)
    wmu, bmu = init_linear(k3, hidden_size, action_size, weight_scale=0.01)
    wsg, bsg = init_linear(k4, hidden_size, action_size, weight_scale=0.01)
    return (w1, b1, w2, b2, wmu, bmu, wsg, bsg)


if __name__ == "__main__":
    state_size, action_size, hidden_size = 16, 4, 32

    key = jax.random.PRNGKey(0)
    k_param, k_x, k_batch, k_eps1, k_eps2 = jax.random.split(key, 5)

    params = init_actor_params(k_param, state_size, action_size, hidden_size)
    packed = pack_actor_params(params, state_size, hidden_size, action_size)

    # forward(): single state, reshaped to (1, -1) as in the PyTorch module.
    x = jax.random.normal(k_x, (state_size,), jnp.float32)
    action, log_probs = actor_critic_forward(
        x, packed, k_eps1,
        state_size=state_size, hidden_size=hidden_size, action_size=action_size)
    jax.block_until_ready((action, log_probs))
    assert action.shape == (1, action_size) and log_probs.shape == (1, action_size)
    assert bool(jnp.all(jnp.isfinite(action))) and bool(jnp.all(jnp.isfinite(log_probs)))
    assert bool(jnp.all(jnp.abs(action) <= 1.0))

    # batched act(): the main throughput lever (amortizes launch/DMA overhead);
    # B=64 -> 2 parallel grid tiles (both TCs busy on v7x).
    xb = jax.random.normal(k_batch, (64, state_size), jnp.float32)
    a_b, lp_b = actor_critic_act(
        xb, packed, k_eps2,
        state_size=state_size, hidden_size=hidden_size, action_size=action_size)
    jax.block_until_ready((a_b, lp_b))
    assert a_b.shape == (64, action_size) and lp_b.shape == (64, action_size)
    assert bool(jnp.all(jnp.isfinite(a_b))) and bool(jnp.all(jnp.isfinite(lp_b)))
    assert bool(jnp.all(jnp.abs(a_b) <= 1.0))

    print("KERNEL_OK")
</pallas_src>

<mosaic_0001>
module attributes {stable_mosaic.version = 11 : i64} {
  func.func @kernel(%arg0: i32, %arg1: memref<8x16xf32, #tpu.memory_space<vmem>>, %arg2: memref<8x4xf32, #tpu.memory_space<vmem>>, %arg3: memref<136x128xf32, #tpu.memory_space<vmem>>, %arg4: memref<8x128xf32, #tpu.memory_space<vmem>>) attributes {dimension_semantics = [#tpu.dimension_semantics<parallel>], iteration_bounds = array<i64: 1>, scalar_prefetch = 0 : i64, scratch_operands = 0 : i64, tpu.core_type = #tpu.core_type<tc>, window_params = [{transform_indices = @transform_0, window_bounds = array<i64: 8, 16>}, {transform_indices = @transform_1, window_bounds = array<i64: 8, 4>}, {pipeline_mode = #tpu.pipeline_mode<synchronous>, transform_indices = @transform_2, window_bounds = array<i64: 136, 128>}, {transform_indices = @transform_3, window_bounds = array<i64: 8, 128>}]} {
    %c0 = arith.constant 0 : index
    %c0_0 = arith.constant 0 : index
    %0 = vector.load %arg1[%c0, %c0_0] : memref<8x16xf32, #tpu.memory_space<vmem>>, vector<8x16xf32>
    %c0_1 = arith.constant 0 : index
    %c0_2 = arith.constant 0 : index
    %1 = vector.load %arg3[%c0_1, %c0_2] : memref<136x128xf32, #tpu.memory_space<vmem>>, vector<16x64xf32>
    %c16 = arith.constant 16 : index
    %c0_3 = arith.constant 0 : index
    %2 = vector.load %arg3[%c16, %c0_3] : memref<136x128xf32, #tpu.memory_space<vmem>>, vector<1x64xf32>
    %cst = arith.constant dense<0.000000e+00> : vector<8x64xf32>
    %3 = tpu.matmul %0, %1, %cst {dimension_numbers = #tpu.dot_dimension_numbers<[1], [0], [0], [1], [0, 0, 1, 1], [], []>} : vector<8x16xf32>, vector<16x64xf32>, vector<8x64xf32> -> vector<8x64xf32>
    %4 = vector.broadcast %2 : vector<1x64xf32> to vector<8x64xf32>
    %5 = arith.addf %3, %4 : vector<8x64xf32>
    %cst_4 = arith.constant 0.000000e+00 : f32
    %6 = vector.broadcast %cst_4 : f32 to vector<8x64xf32>
    %7 = arith.maximumf %5, %6 : vector<8x64xf32>
    %c24 = arith.constant 24 : index
    %c0_5 = arith.constant 0 : index
    %8 = vector.load %arg3[%c24, %c0_5] : memref<136x128xf32, #tpu.memory_space<vmem>>, vector<64x32xf32>
    %c88 = arith.constant 88 : index
    %c0_6 = arith.constant 0 : index
    %9 = vector.load %arg3[%c88, %c0_6] : memref<136x128xf32, #tpu.memory_space<vmem>>, vector<1x32xf32>
    %cst_7 = arith.constant dense<0.000000e+00> : vector<8x32xf32>
    %10 = tpu.matmul %7, %8, %cst_7 {dimension_numbers = #tpu.dot_dimension_numbers<[1], [0], [0], [1], [0, 0, 1, 1], [], []>} : vector<8x64xf32>, vector<64x32xf32>, vector<8x32xf32> -> vector<8x32xf32>
    %11 = vector.broadcast %9 : vector<1x32xf32> to vector<8x32xf32>
    %12 = arith.addf %10, %11 : vector<8x32xf32>
    %cst_8 = arith.constant 0.000000e+00 : f32
    %13 = vector.broadcast %cst_8 : f32 to vector<8x32xf32>
    %14 = arith.maximumf %12, %13 : vector<8x32xf32>
    %c96 = arith.constant 96 : index
    %c0_9 = arith.constant 0 : index
    %15 = vector.load %arg3[%c96, %c0_9] : memref<136x128xf32, #tpu.memory_space<vmem>>, vector<32x8xf32>
    %c128 = arith.constant 128 : index
    %c0_10 = arith.constant 0 : index
    %16 = vector.load %arg3[%c128, %c0_10] : memref<136x128xf32, #tpu.memory_space<vmem>>, vector<1x8xf32>
    %cst_11 = arith.constant dense<0.000000e+00> : vector<8x8xf32>
    %17 = tpu.matmul %14, %15, %cst_11 {dimension_numbers = #tpu.dot_dimension_numbers<[1], [0], [0], [1], [0, 0, 1, 1], [], []>} : vector<8x32xf32>, vector<32x8xf32>, vector<8x8xf32> -> vector<8x8xf32>
    %18 = vector.broadcast %16 : vector<1x8xf32> to vector<8x8xf32>
    %19 = arith.addf %17, %18 : vector<8x8xf32>
    %20 = vector.extract_strided_slice %19 {offsets = [0, 0], sizes = [8, 4], strides = [1, 1]} : vector<8x8xf32> to vector<8x4xf32>
    %21 = math.tanh %20 : vector<8x4xf32>
    %22 = vector.extract_strided_slice %19 {offsets = [0, 4], sizes = [8, 4], strides = [1, 1]} : vector<8x8xf32> to vector<8x4xf32>
    %cst_12 = arith.constant 2.000000e+01 : f32
    %23 = vector.broadcast %cst_12 : f32 to vector<8x4xf32>
    %24 = arith.cmpf ogt, %22, %23 : vector<8x4xf32>
    %cst_13 = arith.constant 2.000000e+01 : f32
    %25 = vector.broadcast %cst_13 : f32 to vector<8x4xf32>
    %26 = arith.minimumf %22, %25 : vector<8x4xf32>
    %27 = math.exp %26 : vector<8x4xf32>
    %28 = math.log1p %27 : vector<8x4xf32>
    %29 = arith.select %24, %22, %28 : vector<8x4xi1>, vector<8x4xf32>
    %cst_14 = arith.constant 5.000000e-05 : f32
    %30 = vector.broadcast %cst_14 : f32 to vector<8x4xf32>
    %31 = arith.addf %29, %30 : vector<8x4xf32>
    %c0_15 = arith.constant 0 : index
    %c0_16 = arith.constant 0 : index
    %32 = vector.load %arg2[%c0_15, %c0_16] : memref<8x4xf32, #tpu.memory_space<vmem>>, vector<8x4xf32>
    %33 = arith.mulf %31, %32 : vector<8x4xf32>
    %34 = arith.addf %21, %33 : vector<8x4xf32>
    %cst_17 = arith.constant -1.000000e+00 : f32
    %cst_18 = arith.constant 1.000000e+00 : f32
    %35 = vector.broadcast %cst_17 : f32 to vector<8x4xf32>
    %36 = arith.maximumf %35, %34 : vector<8x4xf32>
    %37 = vector.broadcast %cst_18 : f32 to vector<8x4xf32>
    %38 = arith.minimumf %37, %36 : vector<8x4xf32>
    %cst_19 = arith.constant 1.000000e+00 : f32
    %39 = vector.broadcast %cst_19 : f32 to vector<8x4xf32>
    %40 = arith.divf %39, %31 : vector<8x4xf32>
    %41 = arith.subf %38, %21 : vector<8x4xf32>
    %42 = arith.mulf %41, %40 : vector<8x4xf32>
    %cst_20 = arith.constant -5.000000e-01 : f32
    %43 = vector.broadcast %cst_20 : f32 to vector<8x4xf32>
    %44 = arith.mulf %43, %42 : vector<8x4xf32>
    %45 = arith.mulf %44, %42 : vector<8x4xf32>
    %46 = math.log %31 : vector<8x4xf32>
    %47 = arith.subf %45, %46 : vector<8x4xf32>
    %cst_21 = arith.constant 0.918938517 : f32
    %48 = vector.broadcast %cst_21 : f32 to vector<8x4xf32>
    %49 = arith.subf %47, %48 : vector<8x4xf32>
    %cst_22 = arith.constant 0.000000e+00 : f32
    %50 = vector.broadcast %cst_22 : f32 to vector<8x120xf32>
    %51 = tpu.concatenate %38, %49, %50 in 1 : vector<8x4xf32>, vector<8x4xf32>, vector<8x120xf32> -> vector<8x128xf32>
    %c0_23 = arith.constant 0 : index
    %c0_24 = arith.constant 0 : index
    %52 = vector.load %arg4[%c0_23, %c0_24] : memref<8x128xf32, #tpu.memory_space<vmem>>, vector<8x128xf32>
    tpu.vector_store %arg4[%c0_23, %c0_24], %51 {strides = array<i32>} : memref<8x128xf32, #tpu.memory_space<vmem>>, vector<8x128xf32>,
    return
  }
  func.func @transform_0(%arg0: i32) -> (i32, i32) {
    %c0_i32 = arith.constant 0 : i32
    %c0_i32_0 = arith.constant 0 : i32
    return %arg0, %c0_i32 : i32, i32
  }
  func.func @transform_1(%arg0: i32) -> (i32, i32) {
    %c0_i32 = arith.constant 0 : i32
    %c0_i32_0 = arith.constant 0 : i32
    return %arg0, %c0_i32 : i32, i32
  }
  func.func @transform_2(%arg0: i32) -> (i32, i32) {
    %c0_i32 = arith.constant 0 : i32
    %c0_i32_0 = arith.constant 0 : i32
    %c0_i32_1 = arith.constant 0 : i32
    return %c0_i32, %c0_i32_0 : i32, i32
  }
  func.func @transform_3(%arg0: i32) -> (i32, i32) {
    %c0_i32 = arith.constant 0 : i32
    %c0_i32_0 = arith.constant 0 : i32
    return %arg0, %c0_i32 : i32, i32
  }
}

</mosaic_0001>

<llo_original>
// kernel: tpu_custom_call.1
$region0: #{tpu_custom_call.1}
  #allocation0 [shape = 'u32[]', space=smem, size = 0x4, offset = 0x4, fixed_abs, tag = 'smem constant byte address 0x4 - core index']
  #allocation1 [shape = 'u32[144,128]{1,0:T(1,128)}', space=vmem, size = 0x12000, scoped, tag = 'internal scratch']
  %s0 = inlined_call_operand.vmem [shape: f32[8,16], index: 0, kind: input, shape index: {}]
  %s1 = inlined_call_operand.vmem [shape: f32[8,4], index: 1, kind: input, shape index: {}]
  %s2 = inlined_call_operand.hbm [shape: f32[136,128], index: 2, kind: input, shape index: {}]
  %s3 = inlined_call_operand.hbm [shape: f32[8,128], index: 3, kind: output, shape index: {}]
  %s4 = sld [smem:[#allocation0]]
  $region26: #{tpu_custom_call.1} parent=0
    _
  %s6 = ssub.s32 1, %s4
  %s7 = scalar_select 0, %s6, %s4
  $region1: #{tpu_custom_call.1} parent=0
    #allocation2 [shape = 'u8[69632]{0}', space=vmem, size = 0x11000, scoped, tag = 'input window, operand 2, single buffered']
    #allocation3 [shape = 's32[1]{0}', space=sflag, size = 0x4, scoped, tag = 'scoped memory for tpu_custom_call.1']
    #allocation4 [shape = 's32[1]{0}', space=sflag, size = 0x4, scoped, tag = 'scoped memory for tpu_custom_call.1']
    #allocation5 [shape = 'u8[4096]{0}', space=vmem, size = 0x1000, scoped, tag = 'output window, operand 0, single buffered']
    %8 = vsyncpa [#allocation3], 0
    %9 = vsyncpa [#allocation4], 0
    // Predicated region
    $region2: #{tpu_custom_call.1} parent=1 // pred_check
      _
    $region3: #{tpu_custom_call.1} parent=1 // pred_check_branch
      %11 = sbr.rel (0) target = $region5
    $region4: #{tpu_custom_call.1} parent=1 // pred_region
      _
    $region5: #{tpu_custom_call.1} parent=1 // pred_fallthru
      _
    // Predicated region
    $region6: #{tpu_custom_call.1} parent=1 // pred_check
      _
    $region7: #{tpu_custom_call.1} parent=1 // pred_check_branch
      %13 = sbr.rel (0) target = $region9
    $region8: #{tpu_custom_call.1} parent=1 // pred_region
      _
    $region9: #{tpu_custom_call.1} parent=1 // pred_fallthru
      _
    // Predicated region
    $region10: #{tpu_custom_call.1} parent=1 // pred_check
      _
    $region11: #{tpu_custom_call.1} parent=1 // pred_check_branch
      %15 = sbr.rel (0) target = $region13
    $region12: #{tpu_custom_call.1} parent=1 // pred_region
      %s17 = ssub.s32 2176, 2176
      %18 = vsyncadd [#allocation3], %s17
      %s19 = sshll.u32 [#allocation2], 4
      %s20 = int_to_ptr.vmem [resolvable:$true] %s19
      %25 = dma.hbm_to_vmem [thread:$0]  %s2, 2176, %s20, [#allocation3], 128, 128, 8
    $region13: #{tpu_custom_call.1} parent=1 // pred_fallthru
      _
    // Predicated region
    $region14: #{tpu_custom_call.1} parent=1 // pred_check
      _
    $region15: #{tpu_custom_call.1} parent=1 // pred_check_branch
      %27 = sbr.rel (0) target = $region17
    $region16: #{tpu_custom_call.1} parent=1 // pred_region
      %28 = dma.done [#allocation3], 2176
    $region17: #{tpu_custom_call.1} parent=1 // pred_fallthru
      _
    %v29 = vld [vmem:[%s0] sm:$0xff]
    %v30 = vld [vmem:[#allocation2] sm:$0xff]
    %v31 = vld [vmem:[#allocation2 + $0x8] sm:$0xff]
    %v32 = vld [vmem:[#allocation2 + $0x10] sm:$0x1]
    %v33 = vlaneseq
    %v34 = vshrl.u32 %v33, 7
    %v35 = vsub.s32 0, %v34
    %v36 = vrot.slane %v32, %v35
    %vm37 = vcmask 130048
    %v39 = vsel %vm37, %v29, 0
    %41 = vmatprep.subr.mxu0 0.0
    %42 = vmatpush1.msra.mxu0 0.0
    %43 = vmatprep.subr.mxu0 0.0
    %44 = vmatpush1.msra.mxu0 0.0
    %45 = vmatprep.subr.mxu0 0.0
    %46 = vmatpush1.msra.mxu0 0.0
    %47 = vmatprep.subr.mxu0 0.0
    %48 = vmatpush1.msra.mxu0 0.0
    %49 = vmatprep.subr.mxu0 0.0
    %50 = vmatpush1.msra.mxu0 0.0
    %51 = vmatprep.subr.mxu0 0.0
    %52 = vmatpush1.msra.mxu0 0.0
    %53 = vmatprep.subr.mxu0 0.0
    %54 = vmatpush1.msra.mxu0 0.0
    %55 = vmatprep.subr.mxu0 0.0
    %56 = vmatpush1.msra.mxu0 0.0
    %57 = vmatprep.subr.mxu0 0.0
    %58 = vmatpush1.msra.mxu0 0.0
    %59 = vmatprep.subr.mxu0 0.0
    %60 = vmatpush1.msra.mxu0 0.0
    %61 = vmatprep.subr.mxu0 0.0
    %62 = vmatpush1.msra.mxu0 0.0
    %63 = vmatprep.subr.mxu0 0.0
    %64 = vmatpush1.msra.mxu0 0.0
    %65 = vmatprep.subr.mxu0 0.0
    %66 = vmatpush1.msra.mxu0 0.0
    %67 = vmatprep.subr.mxu0 0.0
    %68 = vmatpush1.msra.mxu0 0.0
    %69 = vmatprep.subr.mxu0 0.0
    %70 = vmatpush1.msra.mxu0 %v31
    %71 = vmatprep.subr.mxu0 0.0
    %72 = vmatpush1.msra.mxu0 %v30
    %73 = vmatprep.subr.mxu0 0.0
    %74 = vmatpush2.msra.mxu0 0.0
    %75 = vmatprep.subr.mxu0 0.0
    %76 = vmatpush2.msra.mxu0 0.0
    %77 = vmatprep.subr.mxu0 0.0
    %78 = vmatpush2.msra.mxu0 0.0
    %79 = vmatprep.subr.mxu0 0.0
    %80 = vmatpush2.msra.mxu0 0.0
    %81 = vmatprep.subr.mxu0 0.0
    %82 = vmatpush2.msra.mxu0 0.0
    %83 = vmatprep.subr.mxu0 0.0
    %84 = vmatpush2.msra.mxu0 0.0
    %85 = vmatprep.subr.mxu0 0.0
    %86 = vmatpush2.msra.mxu0 0.0
    %87 = vmatprep.subr.mxu0 0.0
    %88 = vmatpush2.msra.mxu0 0.0
    %89 = vmatprep.subr.mxu0 0.0
    %90 = vmatpush2.msra.mxu0 0.0
    %91 = vmatprep.subr.mxu0 0.0
    %92 = vmatpush2.msra.mxu0 0.0
    %93 = vmatprep.subr.mxu0 0.0
    %94 = vmatpush2.msra.mxu0 0.0
    %95 = vmatprep.subr.mxu0 0.0
    %96 = vmatpush2.msra.mxu0 0.0
    %97 = vmatprep.subr.mxu0 0.0
    %98 = vmatpush2.msra.mxu0 0.0
    %99 = vmatprep.subr.mxu0 0.0
    %100 = vmatpush2.msra.mxu0 0.0
    %101 = vmatprep.subr.mxu0 0.0
    %102 = vmatpush2.msra.mxu0 0.0
    %103 = vmatprep.subr.mxu0 0.0
    %104 = vmatpush2.msra.mxu0 0.0
    %105 = vmatprep.mubr.f32.mxu0 0.0
    %106 = vmatmul.mubr.f32.gmra.mxu0 %v39
    %v107 = vpop.f32.mrf.mxu0
    %v108 = vadd.f32 %v36, %v107
    %v109 = vpop.f32.mrf.mxu0
    %110 = vdwg.mxu0
    %v111 = vmax.f32 %v108, 0.0
    %v112 = vld [vmem:[#allocation2 + $0x18] sm:$0xff]
    %v113 = vld [vmem:[#allocation2 + $0x20] sm:$0xff]
    %v114 = vld [vmem:[#allocation2 + $0x28] sm:$0xff]
    %v115 = vld [vmem:[#allocation2 + $0x30] sm:$0xff]
    %v116 = vld [vmem:[#allocation2 + $0x38] sm:$0xff]
    %v117 = vld [vmem:[#allocation2 + $0x40] sm:$0xff]
    %v118 = vld [vmem:[#allocation2 + $0x48] sm:$0xff]
    %v119 = vld [vmem:[#allocation2 + $0x50] sm:$0xff]
    %v120 = vld [vmem:[#allocation2 + $0x58] sm:$0x1]
    %v121 = vlaneseq
    %v122 = vshrl.u32 %v121, 7
    %v123 = vsub.s32 0, %v122
    %v124 = vrot.slane %v120, %v123
    %vm125 = vcmask 523264
    %v127 = vsel %vm125, %v111, 0
    %129 = vmatprep.subr.mxu0 0.0
    %130 = vmatpush1.msra.mxu0 0.0
    %131 = vmatprep.subr.mxu0 0.0
    %132 = vmatpush1.msra.mxu0 0.0
    %133 = vmatprep.subr.mxu0 0.0
    %134 = vmatpush1.msra.mxu0 0.0
    %135 = vmatprep.subr.mxu0 0.0
    %136 = vmatpush1.msra.mxu0 0.0
    %137 = vmatprep.subr.mxu0 0.0
    %138 = vmatpush1.msra.mxu0 0.0
    %139 = vmatprep.subr.mxu0 0.0
    %140 = vmatpush1.msra.mxu0 0.0
    %141 = vmatprep.subr.mxu0 0.0
    %142 = vmatpush1.msra.mxu0 0.0
    %143 = vmatprep.subr.mxu0 0.0
    %144 = vmatpush1.msra.mxu0 0.0
    %145 = vmatprep.subr.mxu0 0.0
    %146 = vmatpush1.msra.mxu0 %v119
    %147 = vmatprep.subr.mxu0 0.0
    %148 = vmatpush1.msra.mxu0 %v118
    %149 = vmatprep.subr.mxu0 0.0
    %150 = vmatpush1.msra.mxu0 %v117
    %151 = vmatprep.subr.mxu0 0.0
    %152 = vmatpush1.msra.mxu0 %v116
    %153 = vmatprep.subr.mxu0 0.0
    %154 = vmatpush1.msra.mxu0 %v115
    %155 = vmatprep.subr.mxu0 0.0
    %156 = vmatpush1.msra.mxu0 %v114
    %157 = vmatprep.subr.mxu0 0.0
    %158 = vmatpush1.msra.mxu0 %v113
    %159 = vmatprep.subr.mxu0 0.0
    %160 = vmatpush1.msra.mxu0 %v112
    %161 = vmatprep.subr.mxu0 0.0
    %162 = vmatpush2.msra.mxu0 0.0
    %163 = vmatprep.subr.mxu0 0.0
    %164 = vmatpush2.msra.mxu0 0.0
    %165 = vmatprep.subr.mxu0 0.0
    %166 = vmatpush2.msra.mxu0 0.0
    %167 = vmatprep.subr.mxu0 0.0
    %168 = vmatpush2.msra.mxu0 0.0
    %169 = vmatprep.subr.mxu0 0.0
    %170 = vmatpush2.msra.mxu0 0.0
    %171 = vmatprep.subr.mxu0 0.0
    %172 = vmatpush2.msra.mxu0 0.0
    %173 = vmatprep.subr.mxu0 0.0
    %174 = vmatpush2.msra.mxu0 0.0
    %175 = vmatprep.subr.mxu0 0.0
    %176 = vmatpush2.msra.mxu0 0.0
    %177 = vmatprep.subr.mxu0 0.0
    %178 = vmatpush2.msra.mxu0 0.0
    %179 = vmatprep.subr.mxu0 0.0
    %180 = vmatpush2.msra.mxu0 0.0
    %181 = vmatprep.subr.mxu0 0.0
    %182 = vmatpush2.msra.mxu0 0.0
    %183 = vmatprep.subr.mxu0 0.0
    %184 = vmatpush2.msra.mxu0 0.0
    %185 = vmatprep.subr.mxu0 0.0
    %186 = vmatpush2.msra.mxu0 0.0
    %187 = vmatprep.subr.mxu0 0.0
    %188 = vmatpush2.msra.mxu0 0.0
    %189 = vmatprep.subr.mxu0 0.0
    %190 = vmatpush2.msra.mxu0 0.0
    %191 = vmatprep.subr.mxu0 0.0
    %192 = vmatpush2.msra.mxu0 0.0
    %193 = vmatprep.mubr.f32.mxu0 0.0
    %194 = vmatmul.mubr.f32.gmra.mxu0 %v127
    %v195 = vpop.f32.mrf.mxu0
    %v196 = vadd.f32 %v124, %v195
    %v197 = vpop.f32.mrf.mxu0
    %198 = vdwg.mxu0
    %v199 = vmax.f32 %v196, 0.0
    %v200 = vld [vmem:[#allocation2 + $0x60] sm:$0xff]
    %v201 = vld [vmem:[#allocation2 + $0x68] sm:$0xff]
    %v202 = vld [vmem:[#allocation2 + $0x70] sm:$0xff]
    %v203 = vld [vmem:[#allocation2 + $0x78] sm:$0xff]
    %v204 = vld [vmem:[#allocation2 + $0x80] sm:$0x1]
    %v205 = vlaneseq
    %v206 = vshrl.u32 %v205, 7
    %v207 = vsub.s32 0, %v206
    %v208 = vrot.slane %v204, %v207
    %vm209 = vcmask 261120
    %v211 = vsel %vm209, %v199, 0
    %213 = vmatprep.subr.mxu0 0.0
    %214 = vmatpush1.msra.mxu0 0.0
    %215 = vmatprep.subr.mxu0 0.0
    %216 = vmatpush1.msra.mxu0 0.0
    %217 = vmatprep.subr.mxu0 0.0
    %218 = vmatpush1.msra.mxu0 0.0
    %219 = vmatprep.subr.mxu0 0.0
    %220 = vmatpush1.msra.mxu0 0.0
    %221 = vmatprep.subr.mxu0 0.0
    %222 = vmatpush1.msra.mxu0 0.0
    %223 = vmatprep.subr.mxu0 0.0
    %224 = vmatpush1.msra.mxu0 0.0
    %225 = vmatprep.subr.mxu0 0.0
    %226 = vmatpush1.msra.mxu0 0.0
    %227 = vmatprep.subr.mxu0 0.0
    %228 = vmatpush1.msra.mxu0 0.0
    %229 = vmatprep.subr.mxu0 0.0
    %230 = vmatpush1.msra.mxu0 0.0
    %231 = vmatprep.subr.mxu0 0.0
    %232 = vmatpush1.msra.mxu0 0.0
    %233 = vmatprep.subr.mxu0 0.0
    %234 = vmatpush1.msra.mxu0 0.0
    %235 = vmatprep.subr.mxu0 0.0
    %236 = vmatpush1.msra.mxu0 0.0
    %237 = vmatprep.subr.mxu0 0.0
    %238 = vmatpush1.msra.mxu0 %v203
    %239 = vmatprep.subr.mxu0 0.0
    %240 = vmatpush1.msra.mxu0 %v202
    %241 = vmatprep.subr.mxu0 0.0
    %242 = vmatpush1.msra.mxu0 %v201
    %243 = vmatprep.subr.mxu0 0.0
    %244 = vmatpush1.msra.mxu0 %v200
    %245 = vmatprep.subr.mxu0 0.0
    %246 = vmatpush2.msra.mxu0 0.0
    %247 = vmatprep.subr.mxu0 0.0
    %248 = vmatpush2.msra.mxu0 0.0
    %249 = vmatprep.subr.mxu0 0.0
    %250 = vmatpush2.msra.mxu0 0.0
    %251 = vmatprep.subr.mxu0 0.0
    %252 = vmatpush2.msra.mxu0 0.0
    %253 = vmatprep.subr.mxu0 0.0
    %254 = vmatpush2.msra.mxu0 0.0
    %255 = vmatprep.subr.mxu0 0.0
    %256 = vmatpush2.msra.mxu0 0.0
    %257 = vmatprep.subr.mxu0 0.0
    %258 = vmatpush2.msra.mxu0 0.0
    %259 = vmatprep.subr.mxu0 0.0
    %260 = vmatpush2.msra.mxu0 0.0
    %261 = vmatprep.subr.mxu0 0.0
    %262 = vmatpush2.msra.mxu0 0.0
    %263 = vmatprep.subr.mxu0 0.0
    %264 = vmatpush2.msra.mxu0 0.0
    %265 = vmatprep.subr.mxu0 0.0
    %266 = vmatpush2.msra.mxu0 0.0
    %267 = vmatprep.subr.mxu0 0.0
    %268 = vmatpush2.msra.mxu0 0.0
    %269 = vmatprep.subr.mxu0 0.0
    %270 = vmatpush2.msra.mxu0 0.0
    %271 = vmatprep.subr.mxu0 0.0
    %272 = vmatpush2.msra.mxu0 0.0
    %273 = vmatprep.subr.mxu0 0.0
    %274 = vmatpush2.msra.mxu0 0.0
    %275 = vmatprep.subr.mxu0 0.0
    %276 = vmatpush2.msra.mxu0 0.0
    %277 = vmatprep.mubr.f32.mxu0 0.0
    %278 = vmatmul.mubr.f32.gmra.mxu0 %v211
    %v279 = vpop.f32.mrf.mxu0
    %v280 = vadd.f32 %v208, %v279
    %v281 = vpop.f32.mrf.mxu0
    %282 = vdwg.mxu0
    %v283 = vtanh.pop %v280
    %vm284 = vcmp.gt.f32.partialorder %v280, 20.0
    %v285 = vmin.f32 %v280, 20.0
    %v286 = vmul.f32 %v285, 1.442695
    %v287 = vpow.pop %v286
    %v288 = vadd.f32 %v287, 1.0
    %v289 = vlog2.pop %v288
    %v290 = vmul.f32 %v289, 0.6931472
    %v291 = vmul.f32 -0.5, %v287
    %v292 = vadd.f32 %v291, 1.0
    %v293 = vmul.f32 %v292, %v287
    %v294 = vand.u32 2147483647, %v287
    %vm295 = vcmp.lt.f32.partialorder %v294, 0.0004427343
    %v296 = vsel %vm295, %v293, %v290
    %v297 = vsel %vm284, %v280, %v296
    %v298 = vadd.f32 %v297, 5e-05
    %v299 = vld [vmem:[%s1] sm:$0xff]
    %301 = vrot.lane.b32.xlu0 %v299, 4
    %v302 = vpop.permute.xlu0 %301
    %v304 = vmul.f32 %v298, %v302
    %306 = vrot.lane.b32.xlu0 %v304, 124
    %v307 = vpop.permute.xlu0 %306
    %v309 = vadd.f32 %v283, %v307
    %v310 = vmax.f32 %v309, -1.0
    %v311 = vmin.f32 %v310, 1.0
    %v312 = vrcp.pop %v298
    %v313 = vmul.f32 1.0, %v312
    %v314 = vsub.f32 %v311, %v283
    %316 = vrot.lane.b32.xlu0 %v313, 124
    %v317 = vpop.permute.xlu0 %316
    %v319 = vmul.f32 %v314, %v317
    %v320 = vmul.f32 %v319, -0.5
    %v321 = vmul.f32 %v320, %v319
    %v322 = vlog2.pop %v298
    %v323 = vmul.f32 %v322, 0.6931472
    %325 = vrot.lane.b32.xlu0 %v323, 124
    %v326 = vpop.permute.xlu0 %325
    %v328 = vsub.f32 %v321, %v326
    %v329 = vsub.f32 %v328, 0.9189385
    %331 = vrot.lane.b32.xlu0 %v329, 4
    %v332 = vpop.permute.xlu0 %331
    %vm334 = vcmask 31744
    %v335 = vsel %vm334, %v311, %v332
    %vm336 = vcmask 64512
    %v337 = vsel %vm336, %v335, 0.0
    %338 = vst [vmem:[#allocation5] sm:$0xff] %v337
    // Predicated region
    $region18: #{tpu_custom_call.1} parent=1 // pred_check
      _
    $region19: #{tpu_custom_call.1} parent=1 // pred_check_branch
      %340 = sbr.rel (0) target = $region21
    $region20: #{tpu_custom_call.1} parent=1 // pred_region
      %s342 = ssub.s32 128, 128
      %343 = vsyncadd [#allocation4], %s342
      %s345 = sshll.u32 [#allocation5], 4
      %s346 = int_to_ptr.vmem [resolvable:$true] %s345
      %348 = dma.vmem_to_hbm [thread:$0]  %s346, 128, %s3, [#allocation4]
    $region21: #{tpu_custom_call.1} parent=1 // pred_fallthru
      _
    // Predicated region
    $region22: #{tpu_custom_call.1} parent=1 // pred_check
      _
    $region23: #{tpu_custom_call.1} parent=1 // pred_check_branch
      %350 = sbr.rel (0) target = $region25
    $region24: #{tpu_custom_call.1} parent=1 // pred_region
      %351 = dma.done [#allocation4], 128
    $region25: #{tpu_custom_call.1} parent=1 // pred_fallthru
      _
    %352 = vsyncpa [#allocation3], 1
    %353 = vsyncpa [#allocation4], 1

</llo_original>
